<compile_context>
chip_gen: v7x
topology: tpu7x:2x2x1
jax: 0.10.0
libtpu: 0.0.40
codegen_flags: <defaults>
</compile_context>

<pallas_src>
import jax
import jax.numpy as jnp
from jax.experimental import pallas as pl
from jax.experimental.pallas import tpu as pltpu


def _round_up(n, m):
    return ((n + m - 1) // m) * m


def policy_net_kernel(
    x_ref,
    w1_ref, b1_ref,
    w2_ref, b2_ref,
    w3_ref, b3_ref,
    w4_ref, b4_ref,
    out_ref,
):
    """One batch tile: 3x (matmul + bias(+BN folded) + relu), matmul + softmax."""
    cdt = w1_ref.dtype  # MXU compute dtype (bf16); accumulation is always f32.

    x = x_ref[...]  # already bf16 from the wrapper; no in-kernel cast

    # fc1 (+bn1 folded) -> relu      (dropout is identity in eval mode)
    h = jnp.dot(x, w1_ref[...], preferred_element_type=jnp.float32) + b1_ref[...]
    h = jnp.maximum(h, 0.0)

    # fc2 (+bn2 folded) -> relu
    h = jnp.dot(h.astype(cdt), w2_ref[...], preferred_element_type=jnp.float32) + b2_ref[...]
    h = jnp.maximum(h, 0.0)

    # fc3 (+bn3 folded) -> relu   (output lane-padded to 128; padded lanes stay 0)
    h = jnp.dot(h.astype(cdt), w3_ref[...], preferred_element_type=jnp.float32) + b3_ref[...]
    h = jnp.maximum(h, 0.0)

    # fc4 -> softmax over lanes (padded logit lanes carry -1e30 bias -> exp == 0)
    logits = jnp.dot(h.astype(cdt), w4_ref[...], preferred_element_type=jnp.float32) + b4_ref[...]
    m = jnp.max(logits, axis=1, keepdims=True)
    e = jnp.exp(logits - m)
    denom = jnp.sum(e, axis=1, keepdims=True)
    probs = e * pl.reciprocal(denom, approx=False)  # exact normalization; EUP has slack
    out_ref[...] = probs.astype(out_ref.dtype)      # bf16 lane-dense store


def policy_net_forward(x, params, *, block_batch=2048, weight_dtype=jnp.bfloat16):
    """Wrapper: folds BN, pads to lane-dense shapes, runs the batch-tiled kernel."""
    batch, in_dim = x.shape
    hidden = params["w1"].shape[1]
    h3 = params["w3"].shape[1]
    out_dim = params["w4"].shape[1]
    eps = 1e-5

    h3_pad = _round_up(h3, 128)          # lane-dense fc3 activation
    out_pad = _round_up(out_dim, 128)    # lane-dense output slab (unmasked stores)

    # ---- fold BatchNorm1d (eval mode) into the preceding linear layer ----
    def bn_fold(g, be, m, v):
        scale = g * jax.lax.rsqrt(v + eps)
        shift = be - m * scale
        return scale, shift

    s1, t1 = bn_fold(params["g1"], params["be1"], params["m1"], params["v1"])
    s2, t2 = bn_fold(params["g2"], params["be2"], params["m2"], params["v2"])
    s3, t3 = bn_fold(params["g3"], params["be3"], params["m3"], params["v3"])

    w1 = params["w1"] * s1[None, :]
    b1 = params["b1"] * s1 + t1
    w2 = params["w2"] * s2[None, :]
    b2 = params["b2"] * s2 + t2
    w3 = params["w3"] * s3[None, :]
    b3 = params["b3"] * s3 + t3
    w4 = params["w4"]
    b4 = params["b4"]

    # ---- zero-pad weights to lane-dense layouts (mathematically exact) ----
    # x keeps its natural feature dim (block last-dim == full array dim is legal).
    w3p = jnp.zeros((hidden, h3_pad), jnp.float32).at[:, :h3].set(w3)
    b3p = jnp.zeros((h3_pad,), jnp.float32).at[:h3].set(b3)
    w4p = jnp.zeros((h3_pad, out_pad), jnp.float32).at[:h3, :out_dim].set(w4)
    # padded logit lanes: large negative bias -> exp() underflows to exactly 0
    b4p = jnp.full((out_pad,), -1e30, jnp.float32).at[:out_dim].set(b4)

    w1c = w1.astype(weight_dtype)
    w2c = w2.astype(weight_dtype)
    w3c = w3p.astype(weight_dtype)
    w4c = w4p.astype(weight_dtype)

    # ---- batch tiling ----
    tb_full = _round_up(batch, 8)
    tb = min(block_batch, tb_full)
    # v7x: the "parallel" batch axis only shards across the two TensorCores when
    # the grid has >= 2 steps; split large single-tile batches in two.
    if tb == tb_full and batch >= 2048:
        tb = min(tb, _round_up(-(-batch // 2), 8))
    pb = _round_up(batch, tb)

    # bf16 x, cast fused with the (optional) batch pad in one wrapper op.
    if pb == batch:
        x_in = x.astype(weight_dtype)
    else:
        x_in = jnp.zeros((pb, in_dim), weight_dtype).at[:batch, :].set(
            x.astype(weight_dtype))

    operands = (
        x_in,
        w1c, b1[None, :].astype(jnp.float32),
        w2c, b2[None, :].astype(jnp.float32),
        w3c, b3p[None, :],
        w4c, b4p[None, :],
    )

    def const_map(i):
        return (0, 0)

    in_specs = [pl.BlockSpec((tb, in_dim), lambda i: (i, 0))]
    for op in operands[1:]:
        # full-array block, constant index -> stays resident in VMEM across steps
        in_specs.append(pl.BlockSpec(op.shape, const_map))

    flops = 2 * pb * (in_dim * hidden + hidden * hidden
                      + hidden * h3_pad + h3_pad * out_pad)
    bytes_accessed = (sum(int(op.size) * op.dtype.itemsize for op in operands)
                      + pb * out_pad * jnp.dtype(weight_dtype).itemsize)
    cost = pl.CostEstimate(flops=int(flops),
                           transcendentals=int(pb * (out_pad + 1)),
                           bytes_accessed=int(bytes_accessed))

    out = pl.pallas_call(
        policy_net_kernel,
        out_shape=jax.ShapeDtypeStruct((pb, out_pad), weight_dtype),
        grid=(pb // tb,),
        in_specs=in_specs,
        out_specs=pl.BlockSpec((tb, out_pad), lambda i: (i, 0)),
        compiler_params=pltpu.CompilerParams(
            dimension_semantics=("parallel",)),
        cost_estimate=cost,
    )(*operands)

    # Tiny slice + upcast for API stability; consumers that can read the padded
    # bf16 slab (or argmax it) directly should do so and skip this copy.
    return out[:batch, :out_dim].astype(jnp.float32)


def xavier_uniform(key, fan_in, fan_out):
    bound = (6.0 / (fan_in + fan_out)) ** 0.5
    # PyTorch stores Linear weight as (out, in); we store (in, out) for x @ W.
    return jax.random.uniform(key, (fan_in, fan_out), jnp.float32, -bound, bound)


def init_params(key, input_size=20, hidden_size=128, output_size=3):
    h2 = hidden_size // 2
    ks = jax.random.split(key, 4)
    params = {
        "w1": xavier_uniform(ks[0], input_size, hidden_size),
        "b1": jnp.zeros((hidden_size,), jnp.float32),
        "w2": xavier_uniform(ks[1], hidden_size, hidden_size),
        "b2": jnp.zeros((hidden_size,), jnp.float32),
        "w3": xavier_uniform(ks[2], hidden_size, h2),
        "b3": jnp.zeros((h2,), jnp.float32),
        "w4": xavier_uniform(ks[3], h2, output_size),
        "b4": jnp.zeros((output_size,), jnp.float32),
        # BatchNorm1d defaults (never changed by the module __init__):
        "g1": jnp.ones((hidden_size,), jnp.float32),
        "be1": jnp.zeros((hidden_size,), jnp.float32),
        "m1": jnp.zeros((hidden_size,), jnp.float32),
        "v1": jnp.ones((hidden_size,), jnp.float32),
        "g2": jnp.ones((hidden_size,), jnp.float32),
        "be2": jnp.zeros((hidden_size,), jnp.float32),
        "m2": jnp.zeros((hidden_size,), jnp.float32),
        "v2": jnp.ones((hidden_size,), jnp.float32),
        "g3": jnp.ones((h2,), jnp.float32),
        "be3": jnp.zeros((h2,), jnp.float32),
        "m3": jnp.zeros((h2,), jnp.float32),
        "v3": jnp.ones((h2,), jnp.float32),
    }
    return params


def reference_forward(x, params):
    """Plain-JAX f32 reference of the same inference-mode forward pass."""
    eps = 1e-5

    def bn(h, g, b, m, v):
        return (h - m) * jax.lax.rsqrt(v + eps) * g + b

    h = jnp.maximum(bn(x @ params["w1"] + params["b1"],
                       params["g1"], params["be1"], params["m1"], params["v1"]), 0.0)
    h = jnp.maximum(bn(h @ params["w2"] + params["b2"],
                       params["g2"], params["be2"], params["m2"], params["v2"]), 0.0)
    h = jnp.maximum(bn(h @ params["w3"] + params["b3"],
                       params["g3"], params["be3"], params["m3"], params["v3"]), 0.0)
    logits = h @ params["w4"] + params["b4"]
    return jax.nn.softmax(logits, axis=1)


if __name__ == "__main__":
    key = jax.random.PRNGKey(0)
    pkey, xkey = jax.random.split(key)

    input_size, hidden_size, output_size = 20, 128, 3
    batch = 8

    params = init_params(pkey, input_size, hidden_size, output_size)
    x = jax.random.normal(xkey, (batch, input_size), jnp.float32)

    out = jax.block_until_ready(policy_net_forward(x, params))
    ref = reference_forward(x, params)

    assert out.shape == (batch, output_size)
    assert bool(jnp.all(jnp.isfinite(out)))
    # bf16 output rounding -> sums are ~3-digit exact
    assert jnp.allclose(jnp.sum(out, axis=1), 1.0, atol=1e-2)
    # bf16 weights / bf16 I/O vs. the f32 reference
    assert jnp.allclose(out, ref, atol=2e-2, rtol=2e-2)

    print("KERNEL_OK")
</pallas_src>

<mosaic_0001>
module attributes {stable_mosaic.version = 11 : i64} {
  func.func @policy_net_kernel(%arg0: i32, %arg1: memref<8x20xbf16, #tpu.memory_space<vmem>>, %arg2: memref<20x128xbf16, #tpu.memory_space<vmem>>, %arg3: memref<1x128xf32, #tpu.memory_space<vmem>>, %arg4: memref<128x128xbf16, #tpu.memory_space<vmem>>, %arg5: memref<1x128xf32, #tpu.memory_space<vmem>>, %arg6: memref<128x128xbf16, #tpu.memory_space<vmem>>, %arg7: memref<1x128xf32, #tpu.memory_space<vmem>>, %arg8: memref<128x128xbf16, #tpu.memory_space<vmem>>, %arg9: memref<1x128xf32, #tpu.memory_space<vmem>>, %arg10: memref<8x128xbf16, #tpu.memory_space<vmem>>) attributes {dimension_semantics = [#tpu.dimension_semantics<parallel>], iteration_bounds = array<i64: 1>, scalar_prefetch = 0 : i64, scratch_operands = 0 : i64, tpu.core_type = #tpu.core_type<tc>, window_params = [{transform_indices = @transform_0, window_bounds = array<i64: 8, 20>}, {pipeline_mode = #tpu.pipeline_mode<synchronous>, transform_indices = @transform_1, window_bounds = array<i64: 20, 128>}, {pipeline_mode = #tpu.pipeline_mode<synchronous>, transform_indices = @transform_2, window_bounds = array<i64: 1, 128>}, {pipeline_mode = #tpu.pipeline_mode<synchronous>, transform_indices = @transform_3, window_bounds = array<i64: 128, 128>}, {pipeline_mode = #tpu.pipeline_mode<synchronous>, transform_indices = @transform_4, window_bounds = array<i64: 1, 128>}, {pipeline_mode = #tpu.pipeline_mode<synchronous>, transform_indices = @transform_5, window_bounds = array<i64: 128, 128>}, {pipeline_mode = #tpu.pipeline_mode<synchronous>, transform_indices = @transform_6, window_bounds = array<i64: 1, 128>}, {pipeline_mode = #tpu.pipeline_mode<synchronous>, transform_indices = @transform_7, window_bounds = array<i64: 128, 128>}, {pipeline_mode = #tpu.pipeline_mode<synchronous>, transform_indices = @transform_8, window_bounds = array<i64: 1, 128>}, {transform_indices = @transform_9, window_bounds = array<i64: 8, 128>}]} {
    %c0 = arith.constant 0 : index
    %c0_0 = arith.constant 0 : index
    %0 = vector.load %arg1[%c0, %c0_0] : memref<8x20xbf16, #tpu.memory_space<vmem>>, vector<8x20xbf16>
    %c0_1 = arith.constant 0 : index
    %c0_2 = arith.constant 0 : index
    %1 = vector.load %arg2[%c0_1, %c0_2] : memref<20x128xbf16, #tpu.memory_space<vmem>>, vector<20x128xbf16>
    %cst = arith.constant dense<0.000000e+00> : vector<8x128xf32>
    %2 = tpu.matmul %0, %1, %cst {dimension_numbers = #tpu.dot_dimension_numbers<[1], [0], [0], [1], [0, 0, 1, 1], [], []>} : vector<8x20xbf16>, vector<20x128xbf16>, vector<8x128xf32> -> vector<8x128xf32>
    %c0_3 = arith.constant 0 : index
    %c0_4 = arith.constant 0 : index
    %3 = vector.load %arg3[%c0_3, %c0_4] : memref<1x128xf32, #tpu.memory_space<vmem>>, vector<1x128xf32>
    %4 = vector.broadcast %3 : vector<1x128xf32> to vector<8x128xf32>
    %5 = arith.addf %2, %4 : vector<8x128xf32>
    %cst_5 = arith.constant 0.000000e+00 : f32
    %6 = vector.broadcast %cst_5 : f32 to vector<8x128xf32>
    %7 = arith.maximumf %5, %6 : vector<8x128xf32>
    %8 = arith.truncf %7 : vector<8x128xf32> to vector<8x128xbf16>
    %c0_6 = arith.constant 0 : index
    %c0_7 = arith.constant 0 : index
    %9 = vector.load %arg4[%c0_6, %c0_7] : memref<128x128xbf16, #tpu.memory_space<vmem>>, vector<128x128xbf16>
    %cst_8 = arith.constant dense<0.000000e+00> : vector<8x128xf32>
    %10 = tpu.matmul %8, %9, %cst_8 {dimension_numbers = #tpu.dot_dimension_numbers<[1], [0], [0], [1], [0, 0, 1, 1], [], []>} : vector<8x128xbf16>, vector<128x128xbf16>, vector<8x128xf32> -> vector<8x128xf32>
    %c0_9 = arith.constant 0 : index
    %c0_10 = arith.constant 0 : index
    %11 = vector.load %arg5[%c0_9, %c0_10] : memref<1x128xf32, #tpu.memory_space<vmem>>, vector<1x128xf32>
    %12 = vector.broadcast %11 : vector<1x128xf32> to vector<8x128xf32>
    %13 = arith.addf %10, %12 : vector<8x128xf32>
    %cst_11 = arith.constant 0.000000e+00 : f32
    %14 = vector.broadcast %cst_11 : f32 to vector<8x128xf32>
    %15 = arith.maximumf %13, %14 : vector<8x128xf32>
    %16 = arith.truncf %15 : vector<8x128xf32> to vector<8x128xbf16>
    %c0_12 = arith.constant 0 : index
    %c0_13 = arith.constant 0 : index
    %17 = vector.load %arg6[%c0_12, %c0_13] : memref<128x128xbf16, #tpu.memory_space<vmem>>, vector<128x128xbf16>
    %cst_14 = arith.constant dense<0.000000e+00> : vector<8x128xf32>
    %18 = tpu.matmul %16, %17, %cst_14 {dimension_numbers = #tpu.dot_dimension_numbers<[1], [0], [0], [1], [0, 0, 1, 1], [], []>} : vector<8x128xbf16>, vector<128x128xbf16>, vector<8x128xf32> -> vector<8x128xf32>
    %c0_15 = arith.constant 0 : index
    %c0_16 = arith.constant 0 : index
    %19 = vector.load %arg7[%c0_15, %c0_16] : memref<1x128xf32, #tpu.memory_space<vmem>>, vector<1x128xf32>
    %20 = vector.broadcast %19 : vector<1x128xf32> to vector<8x128xf32>
    %21 = arith.addf %18, %20 : vector<8x128xf32>
    %cst_17 = arith.constant 0.000000e+00 : f32
    %22 = vector.broadcast %cst_17 : f32 to vector<8x128xf32>
    %23 = arith.maximumf %21, %22 : vector<8x128xf32>
    %24 = arith.truncf %23 : vector<8x128xf32> to vector<8x128xbf16>
    %c0_18 = arith.constant 0 : index
    %c0_19 = arith.constant 0 : index
    %25 = vector.load %arg8[%c0_18, %c0_19] : memref<128x128xbf16, #tpu.memory_space<vmem>>, vector<128x128xbf16>
    %cst_20 = arith.constant dense<0.000000e+00> : vector<8x128xf32>
    %26 = tpu.matmul %24, %25, %cst_20 {dimension_numbers = #tpu.dot_dimension_numbers<[1], [0], [0], [1], [0, 0, 1, 1], [], []>} : vector<8x128xbf16>, vector<128x128xbf16>, vector<8x128xf32> -> vector<8x128xf32>
    %c0_21 = arith.constant 0 : index
    %c0_22 = arith.constant 0 : index
    %27 = vector.load %arg9[%c0_21, %c0_22] : memref<1x128xf32, #tpu.memory_space<vmem>>, vector<1x128xf32>
    %28 = vector.broadcast %27 : vector<1x128xf32> to vector<8x128xf32>
    %29 = arith.addf %26, %28 : vector<8x128xf32>
    %cst_23 = arith.constant dense<0xFF800000> : vector<8xf32>
    %30 = vector.multi_reduction <maximumf>, %29, %cst_23 [1] : vector<8x128xf32> to vector<8xf32>
    %31 = vector.shape_cast %30 : vector<8xf32> to vector<8x1xf32>
    %32 = vector.broadcast %31 : vector<8x1xf32> to vector<8x128xf32>
    %33 = arith.subf %29, %32 : vector<8x128xf32>
    %34 = math.exp %33 : vector<8x128xf32>
    %cst_24 = arith.constant dense<0.000000e+00> : vector<8xf32>
    %35 = vector.multi_reduction <add>, %34, %cst_24 [1] : vector<8x128xf32> to vector<8xf32>
    %36 = vector.shape_cast %35 : vector<8xf32> to vector<8x1xf32>
    %37 = tpu.reciprocal %36 : vector<8x1xf32> -> vector<8x1xf32>
    %38 = vector.broadcast %37 : vector<8x1xf32> to vector<8x128xf32>
    %39 = arith.mulf %34, %38 : vector<8x128xf32>
    %40 = arith.truncf %39 : vector<8x128xf32> to vector<8x128xbf16>
    %c0_25 = arith.constant 0 : index
    %c0_26 = arith.constant 0 : index
    %41 = vector.load %arg10[%c0_25, %c0_26] : memref<8x128xbf16, #tpu.memory_space<vmem>>, vector<8x128xbf16>
    tpu.vector_store %arg10[%c0_25, %c0_26], %40 {strides = array<i32>} : memref<8x128xbf16, #tpu.memory_space<vmem>>, vector<8x128xbf16>,
    return
  }
  func.func @transform_0(%arg0: i32) -> (i32, i32) {
    %c0_i32 = arith.constant 0 : i32
    %c0_i32_0 = arith.constant 0 : i32
    return %arg0, %c0_i32 : i32, i32
  }
  func.func @transform_1(%arg0: i32) -> (i32, i32) {
    %c0_i32 = arith.constant 0 : i32
    %c0_i32_0 = arith.constant 0 : i32
    %c0_i32_1 = arith.constant 0 : i32
    return %c0_i32, %c0_i32_0 : i32, i32
  }
  func.func @transform_2(%arg0: i32) -> (i32, i32) {
    %c0_i32 = arith.constant 0 : i32
    %c0_i32_0 = arith.constant 0 : i32
    %c0_i32_1 = arith.constant 0 : i32
    return %c0_i32, %c0_i32_0 : i32, i32
  }
  func.func @transform_3(%arg0: i32) -> (i32, i32) {
    %c0_i32 = arith.constant 0 : i32
    %c0_i32_0 = arith.constant 0 : i32
    %c0_i32_1 = arith.constant 0 : i32
    return %c0_i32, %c0_i32_0 : i32, i32
  }
  func.func @transform_4(%arg0: i32) -> (i32, i32) {
    %c0_i32 = arith.constant 0 : i32
    %c0_i32_0 = arith.constant 0 : i32
    %c0_i32_1 = arith.constant 0 : i32
    return %c0_i32, %c0_i32_0 : i32, i32
  }
  func.func @transform_5(%arg0: i32) -> (i32, i32) {
    %c0_i32 = arith.constant 0 : i32
    %c0_i32_0 = arith.constant 0 : i32
    %c0_i32_1 = arith.constant 0 : i32
    return %c0_i32, %c0_i32_0 : i32, i32
  }
  func.func @transform_6(%arg0: i32) -> (i32, i32) {
    %c0_i32 = arith.constant 0 : i32
    %c0_i32_0 = arith.constant 0 : i32
    %c0_i32_1 = arith.constant 0 : i32
    return %c0_i32, %c0_i32_0 : i32, i32
  }
  func.func @transform_7(%arg0: i32) -> (i32, i32) {
    %c0_i32 = arith.constant 0 : i32
    %c0_i32_0 = arith.constant 0 : i32
    %c0_i32_1 = arith.constant 0 : i32
    return %c0_i32, %c0_i32_0 : i32, i32
  }
  func.func @transform_8(%arg0: i32) -> (i32, i32) {
    %c0_i32 = arith.constant 0 : i32
    %c0_i32_0 = arith.constant 0 : i32
    %c0_i32_1 = arith.constant 0 : i32
    return %c0_i32, %c0_i32_0 : i32, i32
  }
  func.func @transform_9(%arg0: i32) -> (i32, i32) {
    %c0_i32 = arith.constant 0 : i32
    %c0_i32_0 = arith.constant 0 : i32
    return %arg0, %c0_i32 : i32, i32
  }
}

</mosaic_0001>

<llo_original>
// kernel: tpu_custom_call.1
$region0: #{tpu_custom_call.1}
  #allocation0 [shape = 'u32[]', space=smem, size = 0x4, offset = 0x4, fixed_abs, tag = 'smem constant byte address 0x4 - core index']
  #allocation1 [shape = 'u32[144,128]{1,0:T(1,128)}', space=vmem, size = 0x12000, scoped, tag = 'internal scratch']
  %s0 = inlined_call_operand.hbm [shape: bf16[8,20], index: 0, kind: input, shape index: {}]
  %s1 = inlined_call_operand.hbm [shape: bf16[20,128], index: 1, kind: input, shape index: {}]
  %s2 = inlined_call_operand.vmem [shape: f32[1,128], index: 2, kind: input, shape index: {}]
  %s3 = inlined_call_operand.hbm [shape: bf16[128,128], index: 3, kind: input, shape index: {}]
  %s4 = inlined_call_operand.vmem [shape: f32[1,128], index: 4, kind: input, shape index: {}]
  %s5 = inlined_call_operand.hbm [shape: bf16[128,128], index: 5, kind: input, shape index: {}]
  %s6 = inlined_call_operand.vmem [shape: f32[1,128], index: 6, kind: input, shape index: {}]
  %s7 = inlined_call_operand.hbm [shape: bf16[128,128], index: 7, kind: input, shape index: {}]
  %s8 = inlined_call_operand.vmem [shape: f32[1,128], index: 8, kind: input, shape index: {}]
  %s9 = inlined_call_operand.hbm [shape: bf16[8,128], index: 9, kind: output, shape index: {}]
  %s10 = sld [smem:[#allocation0]]
  $region66: #{tpu_custom_call.1} parent=0
    _
  %s12 = ssub.s32 1, %s10
  %s13 = scalar_select 0, %s12, %s10
  $region1: #{tpu_custom_call.1} parent=0
    #allocation2 [shape = 'u8[2048]{0}', space=vmem, size = 0x800, scoped, tag = 'input window, operand 0, single buffered']
    #allocation3 [shape = 's32[1]{0}', space=sflag, size = 0x4, scoped, tag = 'scoped memory for tpu_custom_call.1']
    #allocation4 [shape = 's32[1]{0}', space=sflag, size = 0x4, scoped, tag = 'scoped memory for tpu_custom_call.1']
    #allocation5 [shape = 'u8[6144]{0}', space=vmem, size = 0x1800, scoped, tag = 'input window, operand 1, single buffered']
    #allocation6 [shape = 's32[1]{0}', space=sflag, size = 0x4, scoped, tag = 'scoped memory for tpu_custom_call.1']
    #allocation7 [shape = 'u8[32768]{0}', space=vmem, size = 0x8000, scoped, tag = 'input window, operand 3, single buffered']
    #allocation8 [shape = 'u8[32768]{0}', space=vmem, size = 0x8000, scoped, tag = 'input window, operand 5, single buffered']
    #allocation9 [shape = 's32[1]{0}', space=sflag, size = 0x4, scoped, tag = 'scoped memory for tpu_custom_call.1']
    #allocation10 [shape = 'u8[32768]{0}', space=vmem, size = 0x8000, scoped, tag = 'input window, operand 7, single buffered']
    #allocation11 [shape = 'u8[2048]{0}', space=vmem, size = 0x800, scoped, tag = 'output window, operand 0, single buffered']
    %14 = vsyncpa [#allocation3], 0
    %15 = vsyncpa [#allocation6], 0
    %16 = vsyncpa [#allocation9], 0
    %17 = vsyncpa [#allocation4], 0
    // Predicated region
    $region2: #{tpu_custom_call.1} parent=1 // pred_check
      _
    $region3: #{tpu_custom_call.1} parent=1 // pred_check_branch
      %19 = sbr.rel (0) target = $region5
    $region4: #{tpu_custom_call.1} parent=1 // pred_region
      %s21 = ssub.s32 64, 64
      %22 = vsyncadd [#allocation3], %s21
      %s24 = sshll.u32 [#allocation2], 4
      %s25 = int_to_ptr.vmem [resolvable:$true] %s24
      %27 = dma.hbm_to_vmem [thread:$0]  %s0, 64, %s25, [#allocation3]
    $region5: #{tpu_custom_call.1} parent=1 // pred_fallthru
      _
    // Predicated region
    $region6: #{tpu_custom_call.1} parent=1 // pred_check
      _
    $region7: #{tpu_custom_call.1} parent=1 // pred_check_branch
      %29 = sbr.rel (0) target = $region9
    $region8: #{tpu_custom_call.1} parent=1 // pred_region
      %s31 = ssub.s32 192, 192
      %32 = vsyncadd [#allocation6], %s31
      %s33 = sshll.u32 [#allocation5], 4
      %s34 = int_to_ptr.vmem [resolvable:$true] %s33
      %39 = dma.hbm_to_vmem [thread:$0]  %s1, 192, %s34, [#allocation6], 64, 64, 4
    $region9: #{tpu_custom_call.1} parent=1 // pred_fallthru
      _
    // Predicated region
    $region10: #{tpu_custom_call.1} parent=1 // pred_check
      _
    $region11: #{tpu_custom_call.1} parent=1 // pred_check_branch
      %41 = sbr.rel (0) target = $region13
    $region12: #{tpu_custom_call.1} parent=1 // pred_region
      _
    $region13: #{tpu_custom_call.1} parent=1 // pred_fallthru
      _
    // Predicated region
    $region14: #{tpu_custom_call.1} parent=1 // pred_check
      _
    $region15: #{tpu_custom_call.1} parent=1 // pred_check_branch
      %43 = sbr.rel (0) target = $region17
    $region16: #{tpu_custom_call.1} parent=1 // pred_region
      %s45 = ssub.s32 1024, 1024
      %46 = vsyncadd [#allocation6], %s45
      %s47 = sshll.u32 [#allocation7], 4
      %s48 = int_to_ptr.vmem [resolvable:$true] %s47
      %53 = dma.hbm_to_vmem [thread:$0]  %s3, 1024, %s48, [#allocation6], 64, 64, 4
    $region17: #{tpu_custom_call.1} parent=1 // pred_fallthru
      _
    // Predicated region
    $region18: #{tpu_custom_call.1} parent=1 // pred_check
      _
    $region19: #{tpu_custom_call.1} parent=1 // pred_check_branch
      %55 = sbr.rel (0) target = $region21
    $region20: #{tpu_custom_call.1} parent=1 // pred_region
      _
    $region21: #{tpu_custom_call.1} parent=1 // pred_fallthru
      _
    // Predicated region
    $region22: #{tpu_custom_call.1} parent=1 // pred_check
      _
    $region23: #{tpu_custom_call.1} parent=1 // pred_check_branch
      %57 = sbr.rel (0) target = $region25
    $region24: #{tpu_custom_call.1} parent=1 // pred_region
      %s59 = ssub.s32 1024, 1024
      %60 = vsyncadd [#allocation9], %s59
      %s61 = sshll.u32 [#allocation8], 4
      %s62 = int_to_ptr.vmem [resolvable:$true] %s61
      %67 = dma.hbm_to_vmem [thread:$0]  %s5, 1024, %s62, [#allocation9], 64, 64, 4
    $region25: #{tpu_custom_call.1} parent=1 // pred_fallthru
      _
    // Predicated region
    $region26: #{tpu_custom_call.1} parent=1 // pred_check
      _
    $region27: #{tpu_custom_call.1} parent=1 // pred_check_branch
      %69 = sbr.rel (0) target = $region29
    $region28: #{tpu_custom_call.1} parent=1 // pred_region
      _
    $region29: #{tpu_custom_call.1} parent=1 // pred_fallthru
      _
    // Predicated region
    $region30: #{tpu_custom_call.1} parent=1 // pred_check
      _
    $region31: #{tpu_custom_call.1} parent=1 // pred_check_branch
      %71 = sbr.rel (0) target = $region33
    $region32: #{tpu_custom_call.1} parent=1 // pred_region
      %s73 = ssub.s32 1024, 1024
      %74 = vsyncadd [#allocation9], %s73
      %s75 = sshll.u32 [#allocation10], 4
      %s76 = int_to_ptr.vmem [resolvable:$true] %s75
      %81 = dma.hbm_to_vmem [thread:$0]  %s7, 1024, %s76, [#allocation9], 64, 64, 4
    $region33: #{tpu_custom_call.1} parent=1 // pred_fallthru
      _
    // Predicated region
    $region34: #{tpu_custom_call.1} parent=1 // pred_check
      _
    $region35: #{tpu_custom_call.1} parent=1 // pred_check_branch
      %83 = sbr.rel (0) target = $region37
    $region36: #{tpu_custom_call.1} parent=1 // pred_region
      _
    $region37: #{tpu_custom_call.1} parent=1 // pred_fallthru
      _
    // Predicated region
    $region38: #{tpu_custom_call.1} parent=1 // pred_check
      _
    $region39: #{tpu_custom_call.1} parent=1 // pred_check_branch
      %85 = sbr.rel (0) target = $region41
    $region40: #{tpu_custom_call.1} parent=1 // pred_region
      %86 = dma.done [#allocation3], 64
    $region41: #{tpu_custom_call.1} parent=1 // pred_fallthru
      _
    // Predicated region
    $region42: #{tpu_custom_call.1} parent=1 // pred_check
      _
    $region43: #{tpu_custom_call.1} parent=1 // pred_check_branch
      %88 = sbr.rel (0) target = $region45
    $region44: #{tpu_custom_call.1} parent=1 // pred_region
      %89 = dma.done [#allocation6], 192
    $region45: #{tpu_custom_call.1} parent=1 // pred_fallthru
      _
    // Predicated region
    $region46: #{tpu_custom_call.1} parent=1 // pred_check
      _
    $region47: #{tpu_custom_call.1} parent=1 // pred_check_branch
      %91 = sbr.rel (0) target = $region49
    $region48: #{tpu_custom_call.1} parent=1 // pred_region
      %92 = dma.done [#allocation6], 1024
    $region49: #{tpu_custom_call.1} parent=1 // pred_fallthru
      _
    // Predicated region
    $region50: #{tpu_custom_call.1} parent=1 // pred_check
      _
    $region51: #{tpu_custom_call.1} parent=1 // pred_check_branch
      %94 = sbr.rel (0) target = $region53
    $region52: #{tpu_custom_call.1} parent=1 // pred_region
      %95 = dma.done [#allocation9], 1024
    $region53: #{tpu_custom_call.1} parent=1 // pred_fallthru
      _
    // Predicated region
    $region54: #{tpu_custom_call.1} parent=1 // pred_check
      _
    $region55: #{tpu_custom_call.1} parent=1 // pred_check_branch
      %97 = sbr.rel (0) target = $region57
    $region56: #{tpu_custom_call.1} parent=1 // pred_region
      %98 = dma.done [#allocation9], 1024
    $region57: #{tpu_custom_call.1} parent=1 // pred_fallthru
      _
    %v100 = vld [vmem:[#allocation2] sm:$0xf]
    %v101 = vld [vmem:[#allocation5] sm:$0xf]
    %v102 = vld [vmem:[#allocation5 + $0x4] sm:$0xf]
    %v103 = vld [vmem:[#allocation5 + $0x8] sm:$0x3]
    %v104 = vld [vmem:[%s2] sm:$0x1]
    %v106 = vlaneseq
    %v107 = vshrl.u32 %v106, 7
    %v108 = vsub.s32 0, %v107
    %v109 = vrot.slane %v104, %v108
    %v114 = vunpack.c.l.b16 %v101
    %v115 = vunpack.c.l.b16 %v102
    %v116 = vunpack.c.l.b16 %v103
    %v117 = vpack.c.b16 %v115, %v114
    %v118 = vpack.c.b16 %v116, %v116
    %vm120 = vcmask 162816
    %v122 = vsel %vm120, %v100, 0
    %vm124 = vcmask 1041408
    %v126 = vsel %vm124, %v118, 0
    %128 = vmatprep.subr.bf16.mxu0 0
    %129 = vmatpush1.bf16.msra.mxu0 %v117
    %130 = vmatprep.subr.bf16.mxu0 0
    %131 = vmatpush1.bf16.msra.mxu0 %v126
    %132 = vmatprep.subr.bf16.mxu0 0
    %133 = vmatpush1.bf16.msra.mxu0 0
    %134 = vmatprep.subr.bf16.mxu0 0
    %135 = vmatpush1.bf16.msra.mxu0 0
    %136 = vmatprep.subr.bf16.mxu0 0
    %137 = vmatpush1.bf16.msra.mxu0 0
    %138 = vmatprep.subr.bf16.mxu0 0
    %139 = vmatpush1.bf16.msra.mxu0 0
    %140 = vmatprep.subr.bf16.mxu0 0
    %141 = vmatpush1.bf16.msra.mxu0 0
    %142 = vmatprep.subr.bf16.mxu0 0
    %143 = vmatpush1.bf16.msra.mxu0 0
    %144 = vmatprep.subr.bf16.mxu0 0
    %145 = vmatpush1.bf16.msra.mxu0 0
    %146 = vmatprep.subr.bf16.mxu0 0
    %147 = vmatpush1.bf16.msra.mxu0 0
    %148 = vmatprep.subr.bf16.mxu0 0
    %149 = vmatpush1.bf16.msra.mxu0 0
    %150 = vmatprep.subr.bf16.mxu0 0
    %151 = vmatpush1.bf16.msra.mxu0 0
    %152 = vmatprep.subr.bf16.mxu0 0
    %153 = vmatpush1.bf16.msra.mxu0 0
    %154 = vmatprep.subr.bf16.mxu0 0
    %155 = vmatpush1.bf16.msra.mxu0 0
    %156 = vmatprep.subr.bf16.mxu0 0
    %157 = vmatpush1.bf16.msra.mxu0 0
    %158 = vmatprep.subr.bf16.mxu0 0
    %159 = vmatpush1.bf16.msra.mxu0 0
    %160 = vmatprep.mubr.bf16.mxu0 0
    %161 = vmatmul.mubr.bf16.gmra.mrb[0].mxu0 %v122
    %v162 = vpop.f32.mrb[0].mxu0
    %v163 = vadd.f32 %v109, %v162
    %v164 = vpop.f32.mrb[0].mxu0
    %v165 = vpop.f32.mrb[0].mxu0
    %v166 = vpop.f32.mrb[0].mxu0
    %167 = vdwg.mxu0
    %v168 = vmax.f32 %v163, 0.0
    %v169 = vpack.c.bf16 %v168, %v168
    %v170 = vld [vmem:[#allocation7] sm:$0xf]
    %v171 = vld [vmem:[#allocation7 + $0x4] sm:$0xf]
    %v172 = vld [vmem:[#allocation7 + $0x8] sm:$0xf]
    %v173 = vld [vmem:[#allocation7 + $0xc] sm:$0xf]
    %v174 = vld [vmem:[#allocation7 + $0x10] sm:$0xf]
    %v175 = vld [vmem:[#allocation7 + $0x14] sm:$0xf]
    %v176 = vld [vmem:[#allocation7 + $0x18] sm:$0xf]
    %v177 = vld [vmem:[#allocation7 + $0x1c] sm:$0xf]
    %v178 = vld [vmem:[#allocation7 + $0x20] sm:$0xf]
    %v179 = vld [vmem:[#allocation7 + $0x24] sm:$0xf]
    %v180 = vld [vmem:[#allocation7 + $0x28] sm:$0xf]
    %v181 = vld [vmem:[#allocation7 + $0x2c] sm:$0xf]
    %v182 = vld [vmem:[#allocation7 + $0x30] sm:$0xf]
    %v183 = vld [vmem:[#allocation7 + $0x34] sm:$0xf]
    %v184 = vld [vmem:[#allocation7 + $0x38] sm:$0xf]
    %v185 = vld [vmem:[#allocation7 + $0x3c] sm:$0xf]
    %v186 = vld [vmem:[%s4] sm:$0x1]
    %v188 = vlaneseq
    %v189 = vshrl.u32 %v188, 7
    %v190 = vsub.s32 0, %v189
    %v191 = vrot.slane %v186, %v190
    %v209 = vunpack.c.l.b16 %v170
    %v210 = vunpack.c.l.b16 %v171
    %v211 = vunpack.c.l.b16 %v172
    %v212 = vunpack.c.l.b16 %v173
    %v213 = vunpack.c.l.b16 %v174
    %v214 = vunpack.c.l.b16 %v175
    %v215 = vunpack.c.l.b16 %v176
    %v216 = vunpack.c.l.b16 %v177
    %v217 = vunpack.c.l.b16 %v178
    %v218 = vunpack.c.l.b16 %v179
    %v219 = vunpack.c.l.b16 %v180
    %v220 = vunpack.c.l.b16 %v181
    %v221 = vunpack.c.l.b16 %v182
    %v222 = vunpack.c.l.b16 %v183
    %v223 = vunpack.c.l.b16 %v184
    %v224 = vunpack.c.l.b16 %v185
    %v225 = vpack.c.b16 %v210, %v209
    %v226 = vpack.c.b16 %v212, %v211
    %v227 = vpack.c.b16 %v214, %v213
    %v228 = vpack.c.b16 %v216, %v215
    %v229 = vpack.c.b16 %v218, %v217
    %v230 = vpack.c.b16 %v220, %v219
    %v231 = vpack.c.b16 %v222, %v221
    %v232 = vpack.c.b16 %v224, %v223
    %241 = vmatprep.subr.bf16.mxu0 0
    %242 = vmatpush1.bf16.msra.mxu0 %v225
    %243 = vmatprep.subr.bf16.mxu0 0
    %244 = vmatpush1.bf16.msra.mxu0 %v226
    %245 = vmatprep.subr.bf16.mxu0 0
    %246 = vmatpush1.bf16.msra.mxu0 %v227
    %247 = vmatprep.subr.bf16.mxu0 0
    %248 = vmatpush1.bf16.msra.mxu0 %v228
    %249 = vmatprep.subr.bf16.mxu0 0
    %250 = vmatpush1.bf16.msra.mxu0 %v229
    %251 = vmatprep.subr.bf16.mxu0 0
    %252 = vmatpush1.bf16.msra.mxu0 %v230
    %253 = vmatprep.subr.bf16.mxu0 0
    %254 = vmatpush1.bf16.msra.mxu0 %v231
    %255 = vmatprep.subr.bf16.mxu0 0
    %256 = vmatpush1.bf16.msra.mxu0 %v232
    %257 = vmatprep.subr.bf16.mxu0 0
    %258 = vmatpush1.bf16.msra.mxu0 0
    %259 = vmatprep.subr.bf16.mxu0 0
    %260 = vmatpush1.bf16.msra.mxu0 0
    %261 = vmatprep.subr.bf16.mxu0 0
    %262 = vmatpush1.bf16.msra.mxu0 0
    %263 = vmatprep.subr.bf16.mxu0 0
    %264 = vmatpush1.bf16.msra.mxu0 0
    %265 = vmatprep.subr.bf16.mxu0 0
    %266 = vmatpush1.bf16.msra.mxu0 0
    %267 = vmatprep.subr.bf16.mxu0 0
    %268 = vmatpush1.bf16.msra.mxu0 0
    %269 = vmatprep.subr.bf16.mxu0 0
    %270 = vmatpush1.bf16.msra.mxu0 0
    %271 = vmatprep.subr.bf16.mxu0 0
    %272 = vmatpush1.bf16.msra.mxu0 0
    %273 = vmatprep.mubr.bf16.mxu0 0
    %274 = vmatmul.mubr.bf16.gmra.mrb[0].mxu0 %v169
    %v275 = vpop.f32.mrb[0].mxu0
    %v276 = vadd.f32 %v191, %v275
    %v277 = vpop.f32.mrb[0].mxu0
    %v278 = vpop.f32.mrb[0].mxu0
    %v279 = vpop.f32.mrb[0].mxu0
    %280 = vdwg.mxu0
    %v281 = vmax.f32 %v276, 0.0
    %v282 = vpack.c.bf16 %v281, %v281
    %v283 = vld [vmem:[#allocation8] sm:$0xf]
    %v284 = vld [vmem:[#allocation8 + $0x4] sm:$0xf]
    %v285 = vld [vmem:[#allocation8 + $0x8] sm:$0xf]
    %v286 = vld [vmem:[#allocation8 + $0xc] sm:$0xf]
    %v287 = vld [vmem:[#allocation8 + $0x10] sm:$0xf]
    %v288 = vld [vmem:[#allocation8 + $0x14] sm:$0xf]
    %v289 = vld [vmem:[#allocation8 + $0x18] sm:$0xf]
    %v290 = vld [vmem:[#allocation8 + $0x1c] sm:$0xf]
    %v291 = vld [vmem:[#allocation8 + $0x20] sm:$0xf]
    %v292 = vld [vmem:[#allocation8 + $0x24] sm:$0xf]
    %v293 = vld [vmem:[#allocation8 + $0x28] sm:$0xf]
    %v294 = vld [vmem:[#allocation8 + $0x2c] sm:$0xf]
    %v295 = vld [vmem:[#allocation8 + $0x30] sm:$0xf]
    %v296 = vld [vmem:[#allocation8 + $0x34] sm:$0xf]
    %v297 = vld [vmem:[#allocation8 + $0x38] sm:$0xf]
    %v298 = vld [vmem:[#allocation8 + $0x3c] sm:$0xf]
    %v299 = vld [vmem:[%s6] sm:$0x1]
    %v301 = vlaneseq
    %v302 = vshrl.u32 %v301, 7
    %v303 = vsub.s32 0, %v302
    %v304 = vrot.slane %v299, %v303
    %v322 = vunpack.c.l.b16 %v283
    %v323 = vunpack.c.l.b16 %v284
    %v324 = vunpack.c.l.b16 %v285
    %v325 = vunpack.c.l.b16 %v286
    %v326 = vunpack.c.l.b16 %v287
    %v327 = vunpack.c.l.b16 %v288
    %v328 = vunpack.c.l.b16 %v289
    %v329 = vunpack.c.l.b16 %v290
    %v330 = vunpack.c.l.b16 %v291
    %v331 = vunpack.c.l.b16 %v292
    %v332 = vunpack.c.l.b16 %v293
    %v333 = vunpack.c.l.b16 %v294
    %v334 = vunpack.c.l.b16 %v295
    %v335 = vunpack.c.l.b16 %v296
    %v336 = vunpack.c.l.b16 %v297
    %v337 = vunpack.c.l.b16 %v298
    %v338 = vpack.c.b16 %v323, %v322
    %v339 = vpack.c.b16 %v325, %v324
    %v340 = vpack.c.b16 %v327, %v326
    %v341 = vpack.c.b16 %v329, %v328
    %v342 = vpack.c.b16 %v331, %v330
    %v343 = vpack.c.b16 %v333, %v332
    %v344 = vpack.c.b16 %v335, %v334
    %v345 = vpack.c.b16 %v337, %v336
    %354 = vmatprep.subr.bf16.mxu0 0
    %355 = vmatpush1.bf16.msra.mxu0 %v338
    %356 = vmatprep.subr.bf16.mxu0 0
    %357 = vmatpush1.bf16.msra.mxu0 %v339
    %358 = vmatprep.subr.bf16.mxu0 0
    %359 = vmatpush1.bf16.msra.mxu0 %v340
    %360 = vmatprep.subr.bf16.mxu0 0
    %361 = vmatpush1.bf16.msra.mxu0 %v341
    %362 = vmatprep.subr.bf16.mxu0 0
    %363 = vmatpush1.bf16.msra.mxu0 %v342
    %364 = vmatprep.subr.bf16.mxu0 0
    %365 = vmatpush1.bf16.msra.mxu0 %v343
    %366 = vmatprep.subr.bf16.mxu0 0
    %367 = vmatpush1.bf16.msra.mxu0 %v344
    %368 = vmatprep.subr.bf16.mxu0 0
    %369 = vmatpush1.bf16.msra.mxu0 %v345
    %370 = vmatprep.subr.bf16.mxu0 0
    %371 = vmatpush1.bf16.msra.mxu0 0
    %372 = vmatprep.subr.bf16.mxu0 0
    %373 = vmatpush1.bf16.msra.mxu0 0
    %374 = vmatprep.subr.bf16.mxu0 0
    %375 = vmatpush1.bf16.msra.mxu0 0
    %376 = vmatprep.subr.bf16.mxu0 0
    %377 = vmatpush1.bf16.msra.mxu0 0
    %378 = vmatprep.subr.bf16.mxu0 0
    %379 = vmatpush1.bf16.msra.mxu0 0
    %380 = vmatprep.subr.bf16.mxu0 0
    %381 = vmatpush1.bf16.msra.mxu0 0
    %382 = vmatprep.subr.bf16.mxu0 0
    %383 = vmatpush1.bf16.msra.mxu0 0
    %384 = vmatprep.subr.bf16.mxu0 0
    %385 = vmatpush1.bf16.msra.mxu0 0
    %386 = vmatprep.mubr.bf16.mxu0 0
    %387 = vmatmul.mubr.bf16.gmra.mrb[0].mxu0 %v282
    %v388 = vpop.f32.mrb[0].mxu0
    %v389 = vadd.f32 %v304, %v388
    %v390 = vpop.f32.mrb[0].mxu0
    %v391 = vpop.f32.mrb[0].mxu0
    %v392 = vpop.f32.mrb[0].mxu0
    %393 = vdwg.mxu0
    %v394 = vmax.f32 %v389, 0.0
    %v395 = vpack.c.bf16 %v394, %v394
    %v396 = vld [vmem:[#allocation10] sm:$0xf]
    %v397 = vld [vmem:[#allocation10 + $0x4] sm:$0xf]
    %v398 = vld [vmem:[#allocation10 + $0x8] sm:$0xf]
    %v399 = vld [vmem:[#allocation10 + $0xc] sm:$0xf]
    %v400 = vld [vmem:[#allocation10 + $0x10] sm:$0xf]
    %v401 = vld [vmem:[#allocation10 + $0x14] sm:$0xf]
    %v402 = vld [vmem:[#allocation10 + $0x18] sm:$0xf]
    %v403 = vld [vmem:[#allocation10 + $0x1c] sm:$0xf]
    %v404 = vld [vmem:[#allocation10 + $0x20] sm:$0xf]
    %v405 = vld [vmem:[#allocation10 + $0x24] sm:$0xf]
    %v406 = vld [vmem:[#allocation10 + $0x28] sm:$0xf]
    %v407 = vld [vmem:[#allocation10 + $0x2c] sm:$0xf]
    %v408 = vld [vmem:[#allocation10 + $0x30] sm:$0xf]
    %v409 = vld [vmem:[#allocation10 + $0x34] sm:$0xf]
    %v410 = vld [vmem:[#allocation10 + $0x38] sm:$0xf]
    %v411 = vld [vmem:[#allocation10 + $0x3c] sm:$0xf]
    %v412 = vld [vmem:[%s8] sm:$0x1]
    %v414 = vlaneseq
    %v415 = vshrl.u32 %v414, 7
    %v416 = vsub.s32 0, %v415
    %v417 = vrot.slane %v412, %v416
    %v435 = vunpack.c.l.b16 %v396
    %v436 = vunpack.c.l.b16 %v397
    %v437 = vunpack.c.l.b16 %v398
    %v438 = vunpack.c.l.b16 %v399
    %v439 = vunpack.c.l.b16 %v400
    %v440 = vunpack.c.l.b16 %v401
    %v441 = vunpack.c.l.b16 %v402
    %v442 = vunpack.c.l.b16 %v403
    %v443 = vunpack.c.l.b16 %v404
    %v444 = vunpack.c.l.b16 %v405
    %v445 = vunpack.c.l.b16 %v406
    %v446 = vunpack.c.l.b16 %v407
    %v447 = vunpack.c.l.b16 %v408
    %v448 = vunpack.c.l.b16 %v409
    %v449 = vunpack.c.l.b16 %v410
    %v450 = vunpack.c.l.b16 %v411
    %v451 = vpack.c.b16 %v436, %v435
    %v452 = vpack.c.b16 %v438, %v437
    %v453 = vpack.c.b16 %v440, %v439
    %v454 = vpack.c.b16 %v442, %v441
    %v455 = vpack.c.b16 %v444, %v443
    %v456 = vpack.c.b16 %v446, %v445
    %v457 = vpack.c.b16 %v448, %v447
    %v458 = vpack.c.b16 %v450, %v449
    %467 = vmatprep.subr.bf16.mxu0 0
    %468 = vmatpush1.bf16.msra.mxu0 %v451
    %469 = vmatprep.subr.bf16.mxu0 0
    %470 = vmatpush1.bf16.msra.mxu0 %v452
    %471 = vmatprep.subr.bf16.mxu0 0
    %472 = vmatpush1.bf16.msra.mxu0 %v453
    %473 = vmatprep.subr.bf16.mxu0 0
    %474 = vmatpush1.bf16.msra.mxu0 %v454
    %475 = vmatprep.subr.bf16.mxu0 0
    %476 = vmatpush1.bf16.msra.mxu0 %v455
    %477 = vmatprep.subr.bf16.mxu0 0
    %478 = vmatpush1.bf16.msra.mxu0 %v456
    %479 = vmatprep.subr.bf16.mxu0 0
    %480 = vmatpush1.bf16.msra.mxu0 %v457
    %481 = vmatprep.subr.bf16.mxu0 0
    %482 = vmatpush1.bf16.msra.mxu0 %v458
    %483 = vmatprep.subr.bf16.mxu0 0
    %484 = vmatpush1.bf16.msra.mxu0 0
    %485 = vmatprep.subr.bf16.mxu0 0
    %486 = vmatpush1.bf16.msra.mxu0 0
    %487 = vmatprep.subr.bf16.mxu0 0
    %488 = vmatpush1.bf16.msra.mxu0 0
    %489 = vmatprep.subr.bf16.mxu0 0
    %490 = vmatpush1.bf16.msra.mxu0 0
    %491 = vmatprep.subr.bf16.mxu0 0
    %492 = vmatpush1.bf16.msra.mxu0 0
    %493 = vmatprep.subr.bf16.mxu0 0
    %494 = vmatpush1.bf16.msra.mxu0 0
    %495 = vmatprep.subr.bf16.mxu0 0
    %496 = vmatpush1.bf16.msra.mxu0 0
    %497 = vmatprep.subr.bf16.mxu0 0
    %498 = vmatpush1.bf16.msra.mxu0 0
    %499 = vmatprep.mubr.bf16.mxu0 0
    %500 = vmatmul.mubr.bf16.gmra.mrb[0].mxu0 %v395
    %v501 = vpop.f32.mrb[0].mxu0
    %v502 = vadd.f32 %v417, %v501
    %v503 = vpop.f32.mrb[0].mxu0
    %v504 = vpop.f32.mrb[0].mxu0
    %v505 = vpop.f32.mrb[0].mxu0
    %506 = vdwg.mxu0
    %507 = vmax.xlane.f32.xlu0 %v502
    %v508 = vpop.xlane.xlu0 %507
    %v509 = vsub.f32 %v502, %v508
    %v510 = vmul.f32 %v509, 1.442695
    %v511 = vpow.pop %v510
    %512 = vadd.xlane.f32.xlu0 %v511
    %v513 = vpop.xlane.xlu0 %512
    %v514 = vrcp.pop %v513
    %v515 = vmul.f32 %v511, %v514
    %v516 = vpack.c.bf16 %v515, %v515
    %517 = vst [vmem:[#allocation11] sm:$0xf] %v516
    // Predicated region
    $region58: #{tpu_custom_call.1} parent=1 // pred_check
      _
    $region59: #{tpu_custom_call.1} parent=1 // pred_check_branch
      %519 = sbr.rel (0) target = $region61
    $region60: #{tpu_custom_call.1} parent=1 // pred_region
      %s521 = ssub.s32 64, 64
      %522 = vsyncadd [#allocation4], %s521
      %s524 = sshll.u32 [#allocation11], 4
      %s525 = int_to_ptr.vmem [resolvable:$true] %s524
      %527 = dma.vmem_to_hbm [thread:$0]  %s525, 64, %s9, [#allocation4]
    $region61: #{tpu_custom_call.1} parent=1 // pred_fallthru
      _
    // Predicated region
    $region62: #{tpu_custom_call.1} parent=1 // pred_check
      _
    $region63: #{tpu_custom_call.1} parent=1 // pred_check_branch
      %529 = sbr.rel (0) target = $region65
    $region64: #{tpu_custom_call.1} parent=1 // pred_region
      %530 = dma.done [#allocation4], 64
    $region65: #{tpu_custom_call.1} parent=1 // pred_fallthru
      _
    %531 = vsyncpa [#allocation3], 1
    %532 = vsyncpa [#allocation6], 1
    %533 = vsyncpa [#allocation9], 1
    %534 = vsyncpa [#allocation4], 1

</llo_original>
